<compile_context>
chip_gen: v7x
topology: tpu7x:2x2x1
jax: 0.10.0
libtpu: 0.0.40
codegen_flags: <defaults>
</compile_context>

<pallas_src>
import functools

import jax
import jax.numpy as jnp
from jax.experimental import pallas as pl
from jax.experimental.pallas import tpu as pltpu

LANES = 128
MAX_BLOCK_ROWS = 2048   # (2048, 128) f32 tile = 1 MiB; 2 inputs x 2 buffers = 4 MiB VMEM
NUM_PARTIALS = 2        # outer "parallel" grid axis (both TCs on v7x; harmless elsewhere)


def _round_up(a, b):
    return ((a + b - 1) // b) * b


def _focal_terms(x, t, gamma):
    """Elementwise focal BCE loss (f32 in, f32 out).

    Numerically-stable rearrangement of the PyTorch reference:
        bce   = max(x, 0) - x*t + log1p(exp(-|x|))
        focal = sigmoid(z)**gamma          with z = -x*(2t - 1)
    which is mathematically identical to
        bce   = x - x*t + max(-x,0) + log(exp(-max) + exp(-x-max))
        focal = exp(gamma * logsigmoid(z))
    but uses fewer EUP (transcendental) ops per element.
    """
    bce = jnp.maximum(x, 0.0) - x * t + jnp.log1p(jnp.exp(-jnp.abs(x)))

    z = -x * (t * 2.0 - 1.0)
    e = jnp.exp(-jnp.abs(z))
    g_int = int(gamma)
    if float(gamma) == float(g_int) and 0 <= g_int <= 8:
        # sigmoid(z)**gamma via stable sigmoid (exact divide) + repeated multiply.
        sig = jnp.where(z >= 0.0, 1.0, e) / (1.0 + e)
        focal = jnp.ones_like(sig)
        for _ in range(g_int):
            focal = focal * sig
    else:
        # General (non-integer) gamma: log-domain form.
        invprobs = jnp.minimum(z, 0.0) - jnp.log1p(e)
        focal = jnp.exp(invprobs * gamma)

    return focal * bce


def _focal_sum_kernel(x_ref, t_ref, acc_ref, *, gamma, rows_valid, block_rows):
    c = pl.program_id(0)                 # "core" / partial index (parallel axis)
    i = pl.program_id(1)                 # row-block index within this partial
    blocks_per_core = pl.num_programs(1)
    b = c * blocks_per_core + i          # global row-block index

    @pl.when(i == 0)
    def _init():
        acc_ref[...] = jnp.zeros_like(acc_ref)

    x = x_ref[...].astype(jnp.float32)
    t = t_ref[...].astype(jnp.float32)
    loss = _focal_terms(x, t, gamma)

    def _accumulate(l):
        # (block_rows, 128) -> (block_rows//8, 8, 128); axis-0 sum is pure VALU
        # vreg adds into the resident (8, 128) f32 output block (no per-tile
        # cross-lane XLU reduce, no scalar loop-carried dependence).
        acc_ref[...] += jnp.sum(l.reshape(-1, 8, LANES), axis=0)

    # Only blocks that overhang the valid row range need masking (last real
    # block when rows % block_rows != 0, plus clamped duplicate blocks).
    needs_mask = (b + 1) * block_rows > rows_valid

    @pl.when(jnp.logical_not(needs_mask))
    def _fast():
        _accumulate(loss)

    @pl.when(needs_mask)
    def _masked():
        row_ids = jax.lax.broadcasted_iota(jnp.int32, loss.shape, 0)
        valid = (b * block_rows + row_ids) < rows_valid
        _accumulate(jnp.where(valid, loss, 0.0))


def focal_loss2(inputs, targets, gamma=2.0):
    if inputs.shape != targets.shape:
        raise ValueError(
            "Target size ({}) must be the same as input size ({})".format(
                targets.shape, inputs.shape
            )
        )

    n = 1
    for d in inputs.shape:
        n *= d

    x = jnp.reshape(inputs, (-1,))   # native dtype; cast happens inside the kernel
    t = jnp.reshape(targets, (-1,))

    rows = n // LANES
    tail = n - rows * LANES

    total = jnp.zeros((), jnp.float32)

    if rows > 0:
        n_main = rows * LANES
        x_main = x if tail == 0 else x[:n_main]
        t_main = t if tail == 0 else t[:n_main]
        x2 = x_main.reshape(rows, LANES)
        t2 = t_main.reshape(rows, LANES)

        block_rows = min(MAX_BLOCK_ROWS, _round_up(rows, 8))
        n_blocks = pl.cdiv(rows, block_rows)
        blocks_per_core = pl.cdiv(n_blocks, NUM_PARTIALS)
        grid = (NUM_PARTIALS, blocks_per_core)

        def in_idx(c, i):
            # Clamp so trailing duplicate steps re-read the last block; their
            # contribution is masked to zero inside the kernel.
            return (jnp.minimum(c * blocks_per_core + i, n_blocks - 1), 0)

        kernel = functools.partial(
            _focal_sum_kernel,
            gamma=float(gamma),
            rows_valid=rows,
            block_rows=block_rows,
        )

        partials = pl.pallas_call(
            kernel,
            out_shape=jax.ShapeDtypeStruct((NUM_PARTIALS * 8, LANES), jnp.float32),
            grid_spec=pltpu.PrefetchScalarGridSpec(
                num_scalar_prefetch=0,
                grid=grid,
                in_specs=[
                    pl.BlockSpec((block_rows, LANES), in_idx),
                    pl.BlockSpec((block_rows, LANES), in_idx),
                ],
                out_specs=pl.BlockSpec((8, LANES), lambda c, i: (c, 0)),
            ),
            compiler_params=pltpu.CompilerParams(
                dimension_semantics=("parallel", "arbitrary"),
                vmem_limit_bytes=32 * 1024 * 1024,
            ),
        )(x2, t2)

        total = total + jnp.sum(partials)

    if tail > 0:
        # <128-element tail: tiny, handled with plain jnp (avoids a full-array pad).
        xt = x[rows * LANES:].astype(jnp.float32)
        tt = t[rows * LANES:].astype(jnp.float32)
        total = total + jnp.sum(_focal_terms(xt, tt, float(gamma)))

    return total / jnp.float32(n)


def _reference(inputs, targets, gamma=2.0):
    # Literal transcription of the PyTorch module's forward.
    x = inputs.astype(jnp.float32)
    t = targets.astype(jnp.float32)
    max_val = jnp.maximum(-x, 0.0)
    loss = x - x * t + max_val + jnp.log(jnp.exp(-max_val) + jnp.exp(-x - max_val))
    invprobs = jax.nn.log_sigmoid(-x * (t * 2.0 - 1.0))
    loss = jnp.exp(invprobs * gamma) * loss
    return jnp.mean(loss)


if __name__ == "__main__":
    key = jax.random.PRNGKey(0)
    k1, k2 = jax.random.split(key)

    # NCHW inputs, same-shape binary targets, matching the module's contract.
    shape = (2, 4, 16, 16)
    logits = jax.random.normal(k1, shape, dtype=jnp.float32) * 2.0
    targets = (jax.random.uniform(k2, shape) > 0.5).astype(jnp.float32)

    out = focal_loss2(logits, targets, gamma=2.0)
    out = jax.block_until_ready(out)

    ref = _reference(logits, targets, gamma=2.0)
    assert jnp.allclose(out, ref, atol=1e-5, rtol=1e-5), (out, ref)

    print("KERNEL_OK")
</pallas_src>

<mosaic_0001>
module attributes {stable_mosaic.version = 11 : i64} {
  func.func @_focal_sum_kernel(%arg0: i32, %arg1: i32, %arg2: memref<16x128xf32, #tpu.memory_space<vmem>>, %arg3: memref<16x128xf32, #tpu.memory_space<vmem>>, %arg4: memref<8x128xf32, #tpu.memory_space<vmem>>) attributes {dimension_semantics = [#tpu.dimension_semantics<parallel>, #tpu.dimension_semantics<arbitrary>], iteration_bounds = array<i64: 2, 1>, scalar_prefetch = 0 : i64, scratch_operands = 0 : i64, tpu.core_type = #tpu.core_type<tc>, window_params = [{transform_indices = @transform_0, window_bounds = array<i64: 16, 128>}, {transform_indices = @transform_1, window_bounds = array<i64: 16, 128>}, {transform_indices = @transform_2, window_bounds = array<i64: 8, 128>}]} {
    %c1_i32 = arith.constant 1 : i32
    %0 = arith.muli %arg0, %c1_i32 : i32
    %1 = arith.addi %0, %arg1 : i32
    %c0_i32 = arith.constant 0 : i32
    %2 = arith.cmpi eq, %arg1, %c0_i32 : i32
    %3 = arith.extui %2 : i1 to i32
    %c0_i32_0 = arith.constant 0 : i32
    %4 = arith.cmpi ne, %3, %c0_i32_0 : i32
    scf.if %4 {
      %cst_17 = arith.constant 0.000000e+00 : f32
      %47 = vector.broadcast %cst_17 : f32 to vector<8x128xf32>
      %c0_18 = arith.constant 0 : index
      %c0_19 = arith.constant 0 : index
      %48 = vector.load %arg4[%c0_18, %c0_19] : memref<8x128xf32, #tpu.memory_space<vmem>>, vector<8x128xf32>
      tpu.vector_store %arg4[%c0_18, %c0_19], %47 {strides = array<i32>} : memref<8x128xf32, #tpu.memory_space<vmem>>, vector<8x128xf32>,
    } else {
    }
    %c0 = arith.constant 0 : index
    %c0_1 = arith.constant 0 : index
    %5 = vector.load %arg2[%c0, %c0_1] : memref<16x128xf32, #tpu.memory_space<vmem>>, vector<16x128xf32>
    %c0_2 = arith.constant 0 : index
    %c0_3 = arith.constant 0 : index
    %6 = vector.load %arg3[%c0_2, %c0_3] : memref<16x128xf32, #tpu.memory_space<vmem>>, vector<16x128xf32>
    %cst = arith.constant 0.000000e+00 : f32
    %7 = vector.broadcast %cst : f32 to vector<16x128xf32>
    %8 = arith.maximumf %5, %7 : vector<16x128xf32>
    %9 = arith.mulf %5, %6 : vector<16x128xf32>
    %10 = arith.subf %8, %9 : vector<16x128xf32>
    %11 = math.absf %5 : vector<16x128xf32>
    %cst_4 = arith.constant 0.000000e+00 : f32
    %12 = vector.broadcast %cst_4 : f32 to vector<16x128xf32>
    %13 = arith.subf %12, %11 : vector<16x128xf32>
    %14 = math.exp %13 : vector<16x128xf32>
    %15 = math.log1p %14 : vector<16x128xf32>
    %16 = arith.addf %10, %15 : vector<16x128xf32>
    %cst_5 = arith.constant 0.000000e+00 : f32
    %17 = vector.broadcast %cst_5 : f32 to vector<16x128xf32>
    %18 = arith.subf %17, %5 : vector<16x128xf32>
    %cst_6 = arith.constant 2.000000e+00 : f32
    %19 = vector.broadcast %cst_6 : f32 to vector<16x128xf32>
    %20 = arith.mulf %6, %19 : vector<16x128xf32>
    %cst_7 = arith.constant 1.000000e+00 : f32
    %21 = vector.broadcast %cst_7 : f32 to vector<16x128xf32>
    %22 = arith.subf %20, %21 : vector<16x128xf32>
    %23 = arith.mulf %18, %22 : vector<16x128xf32>
    %24 = math.absf %23 : vector<16x128xf32>
    %cst_8 = arith.constant 0.000000e+00 : f32
    %25 = vector.broadcast %cst_8 : f32 to vector<16x128xf32>
    %26 = arith.subf %25, %24 : vector<16x128xf32>
    %27 = math.exp %26 : vector<16x128xf32>
    %cst_9 = arith.constant 0.000000e+00 : f32
    %28 = vector.broadcast %cst_9 : f32 to vector<16x128xf32>
    %29 = arith.cmpf oge, %23, %28 : vector<16x128xf32>
    %cst_10 = arith.constant 1.000000e+00 : f32
    %30 = vector.broadcast %cst_10 : f32 to vector<16x128xf32>
    %31 = arith.select %29, %30, %27 : vector<16x128xi1>, vector<16x128xf32>
    %cst_11 = arith.constant 1.000000e+00 : f32
    %32 = vector.broadcast %cst_11 : f32 to vector<16x128xf32>
    %33 = arith.addf %32, %27 : vector<16x128xf32>
    %34 = arith.divf %31, %33 : vector<16x128xf32>
    %cst_12 = arith.constant 1.000000e+00 : f32
    %35 = vector.broadcast %cst_12 : f32 to vector<16x128xf32>
    %36 = arith.mulf %35, %34 : vector<16x128xf32>
    %37 = arith.mulf %36, %34 : vector<16x128xf32>
    %38 = arith.mulf %37, %16 : vector<16x128xf32>
    %c1_i32_13 = arith.constant 1 : i32
    %39 = arith.addi %1, %c1_i32_13 : i32
    %c16_i32 = arith.constant 16 : i32
    %40 = arith.muli %39, %c16_i32 : i32
    %c16_i32_14 = arith.constant 16 : i32
    %41 = arith.cmpi sgt, %40, %c16_i32_14 : i32
    %true = arith.constant true
    %42 = arith.xori %41, %true : i1
    %43 = arith.extui %42 : i1 to i32
    %c0_i32_15 = arith.constant 0 : i32
    %44 = arith.cmpi ne, %43, %c0_i32_15 : i32
    scf.if %44 {
      %c0_17 = arith.constant 0 : index
      %c0_18 = arith.constant 0 : index
      %47 = vector.load %arg4[%c0_17, %c0_18] : memref<8x128xf32, #tpu.memory_space<vmem>>, vector<8x128xf32>
      %48 = vector.shape_cast %38 : vector<16x128xf32> to vector<2x8x128xf32>
      %cst_19 = arith.constant dense<0.000000e+00> : vector<8x128xf32>
      %49 = vector.multi_reduction <add>, %48, %cst_19 [0] : vector<2x8x128xf32> to vector<8x128xf32>
      %50 = arith.addf %47, %49 : vector<8x128xf32>
      %c0_20 = arith.constant 0 : index
      %c0_21 = arith.constant 0 : index
      %51 = vector.load %arg4[%c0_20, %c0_21] : memref<8x128xf32, #tpu.memory_space<vmem>>, vector<8x128xf32>
      tpu.vector_store %arg4[%c0_20, %c0_21], %50 {strides = array<i32>} : memref<8x128xf32, #tpu.memory_space<vmem>>, vector<8x128xf32>,
    } else {
    }
    %45 = arith.extui %41 : i1 to i32
    %c0_i32_16 = arith.constant 0 : i32
    %46 = arith.cmpi ne, %45, %c0_i32_16 : i32
    scf.if %46 {
      %47 = tpu.iota {dimensions = array<i32: 0>} : vector<16x128xi32>
      %c16_i32_17 = arith.constant 16 : i32
      %48 = arith.muli %1, %c16_i32_17 : i32
      %49 = vector.broadcast %48 : i32 to vector<16x128xi32>
      %50 = arith.addi %49, %47 : vector<16x128xi32>
      %c16_i32_18 = arith.constant 16 : i32
      %51 = vector.broadcast %c16_i32_18 : i32 to vector<16x128xi32>
      %52 = arith.cmpi slt, %50, %51 : vector<16x128xi32>
      %cst_19 = arith.constant 0.000000e+00 : f32
      %53 = vector.broadcast %cst_19 : f32 to vector<16x128xf32>
      %54 = arith.select %52, %38, %53 : vector<16x128xi1>, vector<16x128xf32>
      %c0_20 = arith.constant 0 : index
      %c0_21 = arith.constant 0 : index
      %55 = vector.load %arg4[%c0_20, %c0_21] : memref<8x128xf32, #tpu.memory_space<vmem>>, vector<8x128xf32>
      %56 = vector.shape_cast %54 : vector<16x128xf32> to vector<2x8x128xf32>
      %cst_22 = arith.constant dense<0.000000e+00> : vector<8x128xf32>
      %57 = vector.multi_reduction <add>, %56, %cst_22 [0] : vector<2x8x128xf32> to vector<8x128xf32>
      %58 = arith.addf %55, %57 : vector<8x128xf32>
      %c0_23 = arith.constant 0 : index
      %c0_24 = arith.constant 0 : index
      %59 = vector.load %arg4[%c0_23, %c0_24] : memref<8x128xf32, #tpu.memory_space<vmem>>, vector<8x128xf32>
      tpu.vector_store %arg4[%c0_23, %c0_24], %58 {strides = array<i32>} : memref<8x128xf32, #tpu.memory_space<vmem>>, vector<8x128xf32>,
    } else {
    }
    return
  }
  func.func @transform_0(%arg0: i32, %arg1: i32) -> (i32, i32) {
    %c1_i32 = arith.constant 1 : i32
    %0 = arith.muli %arg0, %c1_i32 : i32
    %1 = arith.addi %0, %arg1 : i32
    %c0_i32 = arith.constant 0 : i32
    %2 = arith.minsi %1, %c0_i32 : i32
    %c0_i32_0 = arith.constant 0 : i32
    %c0_i32_1 = arith.constant 0 : i32
    return %2, %c0_i32_0 : i32, i32
  }
  func.func @transform_1(%arg0: i32, %arg1: i32) -> (i32, i32) {
    %c1_i32 = arith.constant 1 : i32
    %0 = arith.muli %arg0, %c1_i32 : i32
    %1 = arith.addi %0, %arg1 : i32
    %c0_i32 = arith.constant 0 : i32
    %2 = arith.minsi %1, %c0_i32 : i32
    %c0_i32_0 = arith.constant 0 : i32
    %c0_i32_1 = arith.constant 0 : i32
    return %2, %c0_i32_0 : i32, i32
  }
  func.func @transform_2(%arg0: i32, %arg1: i32) -> (i32, i32) {
    %c0_i32 = arith.constant 0 : i32
    %c0_i32_0 = arith.constant 0 : i32
    return %arg0, %c0_i32 : i32, i32
  }
}

</mosaic_0001>

<llo_original>
// kernel: tpu_custom_call.1
$region0: #{tpu_custom_call.1}
  #allocation0 [shape = 'u32[]', space=smem, size = 0x4, offset = 0x4, fixed_abs, tag = 'smem constant byte address 0x4 - core index']
  #allocation1 [shape = 'u32[144,128]{1,0:T(1,128)}', space=vmem, size = 0x12000, scoped, tag = 'internal scratch']
  %s0 = inlined_call_operand.hbm [shape: f32[16,128], index: 0, kind: input, shape index: {}]
  %s1 = inlined_call_operand.hbm [shape: f32[16,128], index: 1, kind: input, shape index: {}]
  %s2 = inlined_call_operand.hbm [shape: f32[16,128], index: 2, kind: output, shape index: {}]
  %s3 = sld [smem:[#allocation0]]
  $region61: #{tpu_custom_call.1} parent=0
    _
  %s5 = ssub.s32 1, %s3
  %s6 = scalar_select 0, %s5, %s3
  $region1: #{tpu_custom_call.1} parent=0
    #allocation2 [shape = 'u8[16384]{0}', space=vmem, size = 0x4000, scoped, tag = 'input window, operand 0']
    #allocation3 [shape = 's32[2]{0}', space=sflag, size = 0x8, scoped, tag = 'scoped memory for tpu_custom_call.1']
    #allocation4 [shape = 's32[2]{0}', space=sflag, size = 0x8, scoped, tag = 'scoped memory for tpu_custom_call.1']
    #allocation5 [shape = 'u8[16384]{0}', space=vmem, size = 0x4000, scoped, tag = 'input window, operand 1']
    #allocation6 [shape = 's32[2]{0}', space=sflag, size = 0x8, scoped, tag = 'scoped memory for tpu_custom_call.1']
    #allocation7 [shape = 'u8[8192]{0}', space=vmem, size = 0x2000, scoped, tag = 'output window, operand 0']
    %7 = vsyncpa [#allocation3], 0
    %s8 = scalar_lea.sflag [#allocation3], 1
    %9 = vsyncpa %s8, 0
    %10 = vsyncpa [#allocation6], 0
    %s11 = scalar_lea.sflag [#allocation6], 1
    %12 = vsyncpa %s11, 0
    %13 = vsyncpa [#allocation4], 0
    %s14 = scalar_lea.sflag [#allocation4], 1
    %15 = vsyncpa %s14, 0
    loop: start=0, step=1, limit=4
    $region2: #{tpu_custom_call.1} parent=1 // loop_pre_header
      _
    $region3: #{tpu_custom_call.1} parent=1 // loop_header
      %s17 = sphi 0, %s21
      %p18 = scmp.ge.s32.totalorder %s17, 4
      %s24 = sphi 0, %s36
      %s25 = sphi 0, %s32
      %s26 = sphi 0, %s24
      %s27 = sphi 0, %s25
      %s28 = sphi 0, %s26
      %s29 = sphi 0, %s27
      %s45 = sphi 0, %s47
      %s48 = sphi 0, %s45
      %s49 = sphi 0, %s48
      %s65 = sphi 0, %s49
      %s77 = sphi 0, %s79
      %s80 = sphi 0, %s77
      %s81 = sphi 0, %s80
      %s97 = sphi 0, %s81
      %s103 = sphi 0, %s105
      %s106 = sphi 0, %s103
      %s107 = sphi 0, %s106
      %s123 = sphi 0, %s107
    $region4: #{tpu_custom_call.1} parent=1 // loop_header_branch
      %20 = sbr.rel (%p18) target = $region8
    $region5: #{tpu_custom_call.1} parent=1 // loop_body
      %s22 = ssub.s32 %s17, 1
      %s23 = ssub.s32 %s17, 2
      %s30 = sadd.s32 1, %s25
      %p31 = scmp.ge.s32.totalorder %s30, 1
      %s32 = scalar_select %p31, 0, %s30
      %s33 = sadd.s32 1, %s24
      %s34 = scalar_select %p31, %s33, %s24
      %p35 = scmp.ge.s32.totalorder %s34, 2
      %s36 = scalar_select %p35, 0, %s34
      %s37 = sadd.s32 %s24, %s25
      %p38 = scmp.lt.s32.totalorder %s37, 0
      %s39 = scalar_select %p38, %s37, 0
      %s40 = sadd.s32 %s36, %s32
      %p41 = scmp.lt.s32.totalorder %s40, 0
      %s42 = scalar_select %p41, %s40, 0
      %s43 = ssub.s32 %s39, %s42
      %p44 = scmp.eq.s32.totalorder %s43, 0
      %s46 = sadd.s32 %s45, 1
      %s47 = scalar_select %p44, %s45, %s46
      %p50 = pneg %p44
      %p51 = scmp.eq.s32.totalorder %s17, 1
      %p52 = por %p50, %p51
      %p53 = scmp.ne.s32.totalorder %s45, %s48
      %p54 = scmp.eq.s32.totalorder %s17, 0
      %p55 = por %p53, %p54
      %p56 = scmp.ne.s32.totalorder %s45, %s48
      %p57 = scmp.eq.s32.totalorder %s22, 1
      %p58 = por %p56, %p57
      %p59 = scmp.ne.s32.totalorder %s48, %s49
      %p60 = scmp.eq.s32.totalorder %s22, 0
      %p61 = por %p59, %p60
      %p62 = scmp.ne.s32.totalorder %s48, %s49
      %p63 = scmp.eq.s32.totalorder %s23, 1
      %p64 = por %p62, %p63
      %p66 = scmp.ne.s32.totalorder %s49, %s65
      %p67 = scmp.eq.s32.totalorder %s23, 0
      %p68 = por %p66, %p67
      %s69 = sadd.s32 %s24, %s25
      %p70 = scmp.lt.s32.totalorder %s69, 0
      %s71 = scalar_select %p70, %s69, 0
      %s72 = sadd.s32 %s36, %s32
      %p73 = scmp.lt.s32.totalorder %s72, 0
      %s74 = scalar_select %p73, %s72, 0
      %s75 = ssub.s32 %s71, %s74
      %p76 = scmp.eq.s32.totalorder %s75, 0
      %s78 = sadd.s32 %s77, 1
      %s79 = scalar_select %p76, %s77, %s78
      %p82 = pneg %p76
      %p83 = scmp.eq.s32.totalorder %s17, 1
      %p84 = por %p82, %p83
      %p85 = scmp.ne.s32.totalorder %s77, %s80
      %p86 = scmp.eq.s32.totalorder %s17, 0
      %p87 = por %p85, %p86
      %p88 = scmp.ne.s32.totalorder %s77, %s80
      %p89 = scmp.eq.s32.totalorder %s22, 1
      %p90 = por %p88, %p89
      %p91 = scmp.ne.s32.totalorder %s80, %s81
      %p92 = scmp.eq.s32.totalorder %s22, 0
      %p93 = por %p91, %p92
      %p94 = scmp.ne.s32.totalorder %s80, %s81
      %p95 = scmp.eq.s32.totalorder %s23, 1
      %p96 = por %p94, %p95
      %p98 = scmp.ne.s32.totalorder %s81, %s97
      %p99 = scmp.eq.s32.totalorder %s23, 0
      %p100 = por %p98, %p99
      %s101 = ssub.s32 %s24, %s36
      %p102 = scmp.eq.s32.totalorder %s101, 0
      %s104 = sadd.s32 %s103, 1
      %s105 = scalar_select %p102, %s103, %s104
      %p108 = pneg %p102
      %p109 = scmp.eq.s32.totalorder %s17, 1
      %p110 = por %p108, %p109
      %p111 = scmp.ne.s32.totalorder %s103, %s106
      %p112 = scmp.eq.s32.totalorder %s17, 0
      %p113 = por %p111, %p112
      %p114 = scmp.ne.s32.totalorder %s103, %s106
      %p115 = scmp.eq.s32.totalorder %s22, 1
      %p116 = por %p114, %p115
      %p117 = scmp.ne.s32.totalorder %s106, %s107
      %p118 = scmp.eq.s32.totalorder %s22, 0
      %p119 = por %p117, %p118
      %p120 = scmp.ne.s32.totalorder %s106, %s107
      %p121 = scmp.eq.s32.totalorder %s23, 1
      %p122 = por %p120, %p121
      %p124 = scmp.ne.s32.totalorder %s107, %s123
      %p125 = scmp.eq.s32.totalorder %s23, 0
      %p126 = por %p124, %p125
      %p127 = scmp.le.s32.totalorder 1, %s17
      %p128 = scmp.lt.s32.totalorder %s17, 3
      %p129 = pnand %p127, %p128
      %p130 = pneg %p129
      // Predicated region
      $region9: #{tpu_custom_call.1} parent=5 // pred_check
        _
      $region10: #{tpu_custom_call.1} parent=5 // pred_check_branch
        %132 = sbr.rel (%p129) target = $region12
      $region11: #{tpu_custom_call.1} parent=5 // pred_region
        %s133 = ssub.s32 %s17, 1
      $region12: #{tpu_custom_call.1} parent=5 // pred_fallthru
        _
      %p134 = scmp.lt.s32.totalorder %s17, 2
      // Predicated region
      $region13: #{tpu_custom_call.1} parent=5 // pred_check
        %p135 = pneg %p134
      $region14: #{tpu_custom_call.1} parent=5 // pred_check_branch
        %137 = sbr.rel (%p135) target = $region16
      $region15: #{tpu_custom_call.1} parent=5 // pred_region
        // Predicated region
        $region17: #{tpu_custom_call.1} parent=15 // pred_check
          %p138 = pneg %p55
        $region18: #{tpu_custom_call.1} parent=15 // pred_check_branch
          %140 = sbr.rel (%p138) target = $region20
        $region19: #{tpu_custom_call.1} parent=15 // pred_region
          %s141 = sand.u32 %s45, 1
          %s142 = scalar_lea.sflag [#allocation3], %s141
          %s143 = sand.u32 %s45, 1
          %s144 = smul.addr %s143, 16
          %s145 = scalar_lea.vmem [#allocation2], %s144
          %s146 = sadd.s32 %s24, %s25
          %p147 = scmp.lt.s32.totalorder %s146, 0
          %s148 = scalar_select %p147, %s146, 0
          %s149 = smul.u32 2, %s148
          %s151 = ssub.s32 256, 256
          %152 = vsyncadd %s142, %s151
          %s153 = smul.addr %s149, 128
          %s154 = scalar_lea.hbm %s0, %s153
          %s155 = sshll.u32 %s145, 4
          %s156 = int_to_ptr.vmem [resolvable:$true] %s155
          %161 = dma.hbm_to_vmem [thread:$0]  %s154, 256, %s156, %s142, 128, 128, 8
        $region20: #{tpu_custom_call.1} parent=15 // pred_fallthru
          _
        // Predicated region
        $region21: #{tpu_custom_call.1} parent=15 // pred_check
          %p162 = pneg %p87
        $region22: #{tpu_custom_call.1} parent=15 // pred_check_branch
          %164 = sbr.rel (%p162) target = $region24
        $region23: #{tpu_custom_call.1} parent=15 // pred_region
          %s165 = sand.u32 %s77, 1
          %s166 = scalar_lea.sflag [#allocation6], %s165
          %s167 = sand.u32 %s77, 1
          %s168 = smul.addr %s167, 16
          %s169 = scalar_lea.vmem [#allocation5], %s168
          %s170 = sadd.s32 %s24, %s25
          %p171 = scmp.lt.s32.totalorder %s170, 0
          %s172 = scalar_select %p171, %s170, 0
          %s173 = smul.u32 2, %s172
          %s175 = ssub.s32 256, 256
          %176 = vsyncadd %s166, %s175
          %s177 = smul.addr %s173, 128
          %s178 = scalar_lea.hbm %s1, %s177
          %s179 = sshll.u32 %s169, 4
          %s180 = int_to_ptr.vmem [resolvable:$true] %s179
          %185 = dma.hbm_to_vmem [thread:$0]  %s178, 256, %s180, %s166, 128, 128, 8
        $region24: #{tpu_custom_call.1} parent=15 // pred_fallthru
          _
      $region16: #{tpu_custom_call.1} parent=5 // pred_fallthru
        _
      %p186 = scmp.le.s32.totalorder 1, %s17
      %p187 = scmp.lt.s32.totalorder %s17, 3
      %p188 = pnand %p186, %p187
      %p189 = pneg %p188
      // Predicated region
      $region25: #{tpu_custom_call.1} parent=5 // pred_check
        _
      $region26: #{tpu_custom_call.1} parent=5 // pred_check_branch
        %191 = sbr.rel (%p188) target = $region28
      $region27: #{tpu_custom_call.1} parent=5 // pred_region
        %s192 = ssub.s32 %s17, 1
        %s193 = sand.u32 %s48, 1
        %s194 = scalar_lea.sflag [#allocation3], %s193
        %s195 = sand.u32 %s48, 1
        %s196 = smul.addr %s195, 16
        %s197 = scalar_lea.vmem [#allocation2], %s196
        // Predicated region
        $region29: #{tpu_custom_call.1} parent=27 // pred_check
          %p198 = pneg %p61
        $region30: #{tpu_custom_call.1} parent=27 // pred_check_branch
          %200 = sbr.rel (%p198) target = $region32
        $region31: #{tpu_custom_call.1} parent=27 // pred_region
          %201 = dma.done %s194, 256
        $region32: #{tpu_custom_call.1} parent=27 // pred_fallthru
          _
        %s202 = sand.u32 %s80, 1
        %s203 = scalar_lea.sflag [#allocation6], %s202
        %s204 = sand.u32 %s80, 1
        %s205 = smul.addr %s204, 16
        %s206 = scalar_lea.vmem [#allocation5], %s205
        // Predicated region
        $region33: #{tpu_custom_call.1} parent=27 // pred_check
          %p207 = pneg %p93
        $region34: #{tpu_custom_call.1} parent=27 // pred_check_branch
          %209 = sbr.rel (%p207) target = $region36
        $region35: #{tpu_custom_call.1} parent=27 // pred_region
          %210 = dma.done %s203, 256
        $region36: #{tpu_custom_call.1} parent=27 // pred_fallthru
          _
        %s211 = sand.u32 %s48, 1
        %s212 = scalar_lea.sflag [#allocation3], %s211
        %s213 = sand.u32 %s48, 1
        %s214 = smul.addr %s213, 16
        %s215 = scalar_lea.vmem [#allocation2], %s214
        %p216 = pneg %p61
        %p217 = pneg %p58
        %s218 = sand.u32 %s80, 1
        %s219 = scalar_lea.sflag [#allocation6], %s218
        %s220 = sand.u32 %s80, 1
        %s221 = smul.addr %s220, 16
        %s222 = scalar_lea.vmem [#allocation5], %s221
        %p223 = pneg %p93
        %p224 = pneg %p90
        %p225 = pneg %p119
        %p226 = pneg %p116
        %s227 = sand.u32 %s106, 1
        %s228 = scalar_lea.sflag [#allocation4], %s227
        %s229 = sand.u32 %s106, 1
        %s230 = smul.addr %s229, 8
        %s231 = scalar_lea.vmem [#allocation7], %s230
        %s232 = sadd.s32 %s26, %s27
        %p233 = scmp.lt.s32.totalorder %s232, 0
        %s234 = scalar_select %p233, %s232, 0
        %s235 = smul.u32 2, %s234
        %s236 = sadd.s32 %s26, %s27
        %p237 = scmp.lt.s32.totalorder %s236, 0
        %s238 = scalar_select %p237, %s236, 0
        %s239 = smul.u32 2, %s238
        %s240 = sadd.s32 %s26, %s27
        %p241 = scmp.eq.s32.totalorder %s27, 0
        // Predicated region
        $region37: #{tpu_custom_call.1} parent=27 // pred_check
          %p242 = pneg %p241
        $region38: #{tpu_custom_call.1} parent=27 // pred_check_branch
          %244 = sbr.rel (%p242) target = $region40
        $region39: #{tpu_custom_call.1} parent=27 // pred_region
          %245 = vst [vmem:[%s231] sm:$0xff] 0.0
        $region40: #{tpu_custom_call.1} parent=27 // pred_fallthru
          _
        %v246 = vld [vmem:[%s197] sm:$0xff]
        %v247 = vld [vmem:[%s197 + $0x8] sm:$0xff]
        %v248 = vld [vmem:[%s206] sm:$0xff]
        %v249 = vld [vmem:[%s206 + $0x8] sm:$0xff]
        %v250 = vmax.f32 %v246, 0.0
        %v251 = vmax.f32 %v247, 0.0
        %v252 = vmul.f32 %v246, %v248
        %v253 = vmul.f32 %v247, %v249
        %v254 = vsub.f32 %v250, %v252
        %v255 = vsub.f32 %v251, %v253
        %v256 = vand.u32 2147483647, %v246
        %v257 = vand.u32 2147483647, %v247
        %v258 = vsub.f32 0.0, %v256
        %v259 = vsub.f32 0.0, %v257
        %v260 = vmul.f32 %v258, 1.442695
        %v261 = vpow.pop %v260
        %v262 = vmul.f32 %v259, 1.442695
        %v263 = vpow.pop %v262
        %v264 = vadd.f32 %v261, 1.0
        %v265 = vlog2.pop %v264
        %v266 = vmul.f32 %v265, 0.6931472
        %v267 = vmul.f32 -0.5, %v261
        %v268 = vadd.f32 %v267, 1.0
        %v269 = vmul.f32 %v268, %v261
        %v270 = vand.u32 2147483647, %v261
        %vm271 = vcmp.lt.f32.partialorder %v270, 0.0004427343
        %v272 = vsel %vm271, %v269, %v266
        %v273 = vadd.f32 %v263, 1.0
        %v274 = vlog2.pop %v273
        %v275 = vmul.f32 %v274, 0.6931472
        %v276 = vmul.f32 -0.5, %v263
        %v277 = vadd.f32 %v276, 1.0
        %v278 = vmul.f32 %v277, %v263
        %v279 = vand.u32 2147483647, %v263
        %vm280 = vcmp.lt.f32.partialorder %v279, 0.0004427343
        %v281 = vsel %vm280, %v278, %v275
        %v282 = vadd.f32 %v254, %v272
        %v283 = vadd.f32 %v255, %v281
        %v284 = vsub.f32 0.0, %v246
        %v285 = vsub.f32 0.0, %v247
        %v286 = vmul.f32 %v248, 2.0
        %v287 = vmul.f32 %v249, 2.0
        %v288 = vsub.f32 %v286, 1.0
        %v289 = vsub.f32 %v287, 1.0
        %v290 = vmul.f32 %v284, %v288
        %v291 = vmul.f32 %v285, %v289
        %v292 = vand.u32 2147483647, %v290
        %v293 = vand.u32 2147483647, %v291
        %v294 = vsub.f32 0.0, %v292
        %v295 = vsub.f32 0.0, %v293
        %v296 = vmul.f32 %v294, 1.442695
        %v297 = vpow.pop %v296
        %v298 = vmul.f32 %v295, 1.442695
        %v299 = vpow.pop %v298
        %vm300 = vcmp.ge.f32.partialorder %v290, 0.0
        %vm301 = vcmp.ge.f32.partialorder %v291, 0.0
        %v302 = vsel %vm300, 1.0, %v297
        %v303 = vsel %vm301, 1.0, %v299
        %v304 = vadd.f32 %v297, 1.0
        %v305 = vadd.f32 %v299, 1.0
        %v306 = vrcp.pop %v304
        %v307 = vmul.f32 %v302, %v306
        %v308 = vrcp.pop %v305
        %v309 = vmul.f32 %v303, %v308
        %v310 = vmul.f32 %v307, %v307
        %v311 = vmul.f32 %v309, %v309
        %v312 = vmul.f32 %v310, %v282
        %v313 = vmul.f32 %v311, %v283
        %s314 = sadd.s32 %s240, 1
        %s315 = smul.u32 %s314, 16
        %p316 = scmp.gt.s32.totalorder %s315, 16
        %p317 = scmp.le.s32.totalorder %s315, 16
        // Predicated region
        $region41: #{tpu_custom_call.1} parent=27 // pred_check
          %p318 = pneg %p317
        $region42: #{tpu_custom_call.1} parent=27 // pred_check_branch
          %320 = sbr.rel (%p318) target = $region44
        $region43: #{tpu_custom_call.1} parent=27 // pred_region
          %v321 = vld [vmem:[%s231] sm:$0xff]
          %v322 = vadd.f32 %v312, %v313
          %v323 = vadd.f32 %v321, %v322
          %324 = vst [vmem:[%s231] sm:$0xff] %v323
        $region44: #{tpu_custom_call.1} parent=27 // pred_fallthru
          _
        // Predicated region
        $region45: #{tpu_custom_call.1} parent=27 // pred_check
          %p325 = pneg %p316
        $region46: #{tpu_custom_call.1} parent=27 // pred_check_branch
          %327 = sbr.rel (%p325) target = $region48
        $region47: #{tpu_custom_call.1} parent=27 // pred_region
          %v328 = vlaneseq
          %v329 = vshrl.u32 %v328, 7
          %v330 = vadd.s32 %v329, 8
          %s331 = smul.u32 %s240, 16
          %v332 = vstv %s331
          %v333 = vadd.s32 %v332, %v329
          %v334 = vadd.s32 %v332, %v330
          %vm335 = vcmp.lt.s32.totalorder %v333, 16
          %vm336 = vcmp.lt.s32.totalorder %v334, 16
          %v337 = vsel %vm335, %v312, 0.0
          %v338 = vsel %vm336, %v313, 0.0
          %v339 = vld [vmem:[%s231] sm:$0xff]
          %v340 = vadd.f32 %v337, %v338
          %v341 = vadd.f32 %v339, %v340
          %342 = vst [vmem:[%s231] sm:$0xff] %v341
        $region48: #{tpu_custom_call.1} parent=27 // pred_fallthru
          _
        %s343 = sand.u32 %s106, 1
        %s344 = scalar_lea.sflag [#allocation4], %s343
        %s345 = sand.u32 %s106, 1
        %s346 = smul.addr %s345, 8
        %s347 = scalar_lea.vmem [#allocation7], %s346
        // Predicated region
        $region49: #{tpu_custom_call.1} parent=27 // pred_check
          %p348 = pneg %p116
        $region50: #{tpu_custom_call.1} parent=27 // pred_check_branch
          %350 = sbr.rel (%p348) target = $region52
        $region51: #{tpu_custom_call.1} parent=27 // pred_region
          %s352 = ssub.s32 128, 128
          %353 = vsyncadd %s344, %s352
          %s354 = smul.addr %s26, 128
          %s355 = scalar_lea.hbm %s2, %s354
          %s357 = sshll.u32 %s347, 4
          %s358 = int_to_ptr.vmem [resolvable:$true] %s357
          %360 = dma.vmem_to_hbm [thread:$0]  %s358, 128, %s355, %s344
        $region52: #{tpu_custom_call.1} parent=27 // pred_fallthru
          _
      $region28: #{tpu_custom_call.1} parent=5 // pred_fallthru
        _
      %p361 = scmp.le.s32.totalorder 2, %s17
      // Predicated region
      $region53: #{tpu_custom_call.1} parent=5 // pred_check
        %p362 = pneg %p361
      $region54: #{tpu_custom_call.1} parent=5 // pred_check_branch
        %364 = sbr.rel (%p362) target = $region56
      $region55: #{tpu_custom_call.1} parent=5 // pred_region
        %s365 = ssub.s32 %s17, 2
        // Predicated region
        $region57: #{tpu_custom_call.1} parent=55 // pred_check
          %p366 = pneg %p122
        $region58: #{tpu_custom_call.1} parent=55 // pred_check_branch
          %368 = sbr.rel (%p366) target = $region60
        $region59: #{tpu_custom_call.1} parent=55 // pred_region
          %s369 = sand.u32 %s107, 1
          %s370 = scalar_lea.sflag [#allocation4], %s369
          %s371 = sand.u32 %s107, 1
          %s372 = smul.addr %s371, 8
          %s373 = scalar_lea.vmem [#allocation7], %s372
          %374 = dma.done %s370, 128
        $region60: #{tpu_custom_call.1} parent=55 // pred_fallthru
          _
      $region56: #{tpu_custom_call.1} parent=5 // pred_fallthru
        _
    $region6: #{tpu_custom_call.1} parent=1 // loop_footer
      %s21 = sadd.s32 1, %s17
    $region7: #{tpu_custom_call.1} parent=1 // loop_footer_branch
      %16 = sbr.rel target = $region3
    $region8: #{tpu_custom_call.1} parent=1 // loop_exit
      _
    %375 = vsyncpa [#allocation3], 1
    %s376 = scalar_lea.sflag [#allocation3], 1
    %377 = vsyncpa %s376, 1
    %378 = vsyncpa [#allocation6], 1
    %s379 = scalar_lea.sflag [#allocation6], 1
    %380 = vsyncpa %s379, 1
    %381 = vsyncpa [#allocation4], 1
    %s382 = scalar_lea.sflag [#allocation4], 1
    %383 = vsyncpa %s382, 1

</llo_original>
